<compile_context>
chip_gen: v7x
topology: tpu7x:2x2x1
jax: 0.10.0
libtpu: 0.0.40
codegen_flags: <defaults>
</compile_context>

<pallas_src>
import jax
import jax.numpy as jnp
from jax.experimental import pallas as pl
from jax.experimental.pallas import tpu as pltpu


def _copy_kernel(x_ref, o_ref):
    # Identically-shaped tiles at identical offsets; the chomp is expressed
    # entirely by the output array extent (columns >= L_out are masked on
    # writeback and never reach HBM).
    o_ref[...] = x_ref[...]


def _round_up(x: int, m: int) -> int:
    return ((x + m - 1) // m) * m


def _choose_tiles(rows: int, l_out: int, itemsize: int, budget_bytes: int = 2 << 20):
    """Pick (row_tile, lane_tile): lane-dense, 8/128 aligned, <= ~2 MiB/buffer."""
    # Lane tile: multiple of 128, as wide as the budget allows with >= 8 rows.
    max_tl = max(128, ((budget_bytes // (8 * itemsize)) // 128) * 128)
    tl = min(_round_up(l_out, 128), max_tl)
    # Row tile: multiple of 8, fill the remaining budget, don't exceed rows.
    rt = max(8, ((budget_bytes // (tl * itemsize)) // 8) * 8)
    rt = min(rt, _round_up(rows, 8))
    return rt, tl


def chomp1d(x: jax.Array, chomp_size: int) -> jax.Array:
    """Equivalent of Chomp1d(chomp_size).forward(x) for x of shape (N, C, L).

    chomp_size must be > 0 and < L (PyTorch's x[:, :, :-0] would be empty;
    that degenerate case is intentionally rejected).
    """
    assert chomp_size > 0, "chomp_size must be positive"
    n, c, l = x.shape
    l_out = l - chomp_size
    assert l_out > 0, "chomp_size must be smaller than the sequence length"

    rows = n * c
    x2d = x.reshape(rows, l)  # free, row-major

    r_tile, l_tile = _choose_tiles(rows, l_out, jnp.dtype(x.dtype).itemsize)
    grid = (pl.cdiv(rows, r_tile), pl.cdiv(l_out, l_tile))

    # Identical block shape + offsets for input and output: the input's chomped
    # tail beyond the last output tile is never read from HBM.
    block_spec = pl.BlockSpec((r_tile, l_tile), lambda i, j: (i, j))

    out2d = pl.pallas_call(
        _copy_kernel,
        out_shape=jax.ShapeDtypeStruct((rows, l_out), x.dtype),
        grid_spec=pltpu.PrefetchScalarGridSpec(
            num_scalar_prefetch=0,
            grid=grid,
            in_specs=[block_spec],
            out_specs=block_spec,
        ),
        compiler_params=pltpu.CompilerParams(
            dimension_semantics=("parallel", "parallel"),
        ),
    )(x2d)

    return out2d.reshape(n, c, l_out)


if __name__ == "__main__":
    key = jax.random.PRNGKey(0)
    # Small NCL input consistent with TCN usage: batch=2, channels=4, length=16
    N, C, L = 2, 4, 16
    chomp_size = 3

    x = jax.random.normal(key, (N, C, L), dtype=jnp.float32)

    out = chomp1d(x, chomp_size)
    out = jax.block_until_ready(out)

    # Reference check against plain-JAX slicing (== torch x[:, :, :-chomp_size])
    ref = x[:, :, :-chomp_size]
    assert out.shape == (N, C, L - chomp_size), out.shape
    assert out.dtype == x.dtype
    assert jnp.array_equal(out, ref), "Pallas Chomp1d mismatch vs reference slice"

    print("KERNEL_OK")
</pallas_src>

<mosaic_0001>
module attributes {stable_mosaic.version = 11 : i64} {
  func.func @_copy_kernel(%arg0: i32, %arg1: i32, %arg2: memref<8x128xf32, #tpu.memory_space<vmem>>, %arg3: memref<8x128xf32, #tpu.memory_space<vmem>>) attributes {dimension_semantics = [#tpu.dimension_semantics<parallel>, #tpu.dimension_semantics<parallel>], iteration_bounds = array<i64: 1, 1>, scalar_prefetch = 0 : i64, scratch_operands = 0 : i64, tpu.core_type = #tpu.core_type<tc>, window_params = [{transform_indices = @transform_0, window_bounds = array<i64: 8, 128>}, {transform_indices = @transform_1, window_bounds = array<i64: 8, 128>}]} {
    %c0 = arith.constant 0 : index
    %c0_0 = arith.constant 0 : index
    %0 = vector.load %arg2[%c0, %c0_0] : memref<8x128xf32, #tpu.memory_space<vmem>>, vector<8x128xf32>
    %c0_1 = arith.constant 0 : index
    %c0_2 = arith.constant 0 : index
    %1 = vector.load %arg3[%c0_1, %c0_2] : memref<8x128xf32, #tpu.memory_space<vmem>>, vector<8x128xf32>
    tpu.vector_store %arg3[%c0_1, %c0_2], %0 {strides = array<i32>} : memref<8x128xf32, #tpu.memory_space<vmem>>, vector<8x128xf32>,
    return
  }
  func.func @transform_0(%arg0: i32, %arg1: i32) -> (i32, i32) {
    %c0_i32 = arith.constant 0 : i32
    return %arg0, %arg1 : i32, i32
  }
  func.func @transform_1(%arg0: i32, %arg1: i32) -> (i32, i32) {
    %c0_i32 = arith.constant 0 : i32
    return %arg0, %arg1 : i32, i32
  }
}

</mosaic_0001>

<llo_original>
// kernel: tpu_custom_call.1
$region0: #{tpu_custom_call.1}
  #allocation0 [shape = 'u32[]', space=smem, size = 0x4, offset = 0x4, fixed_abs, tag = 'smem constant byte address 0x4 - core index']
  #allocation1 [shape = 'u32[144,128]{1,0:T(1,128)}', space=vmem, size = 0x12000, scoped, tag = 'internal scratch']
  %s0 = inlined_call_operand.hbm [shape: f32[8,16], index: 0, kind: input, shape index: {}]
  %s1 = inlined_call_operand.hbm [shape: f32[8,13], index: 1, kind: output, shape index: {}]
  %s2 = sld [smem:[#allocation0]]
  $region18: #{tpu_custom_call.1} parent=0
    _
  %s4 = ssub.s32 1, %s2
  %s5 = scalar_select 0, %s4, %s2
  $region1: #{tpu_custom_call.1} parent=0
    #allocation2 [shape = 'u8[4096]{0}', space=vmem, size = 0x1000, scoped, tag = 'input window, operand 0, single buffered']
    #allocation3 [shape = 's32[1]{0}', space=sflag, size = 0x4, scoped, tag = 'scoped memory for tpu_custom_call.1']
    #allocation4 [shape = 's32[1]{0}', space=sflag, size = 0x4, scoped, tag = 'scoped memory for tpu_custom_call.1']
    #allocation5 [shape = 'u8[4096]{0}', space=vmem, size = 0x1000, scoped, tag = 'output window, operand 0, single buffered']
    %6 = vsyncpa [#allocation3], 0
    %7 = vsyncpa [#allocation4], 0
    // Predicated region
    $region2: #{tpu_custom_call.1} parent=1 // pred_check
      _
    $region3: #{tpu_custom_call.1} parent=1 // pred_check_branch
      %9 = sbr.rel (0) target = $region5
    $region4: #{tpu_custom_call.1} parent=1 // pred_region
      %s11 = ssub.s32 128, 128
      %12 = vsyncadd [#allocation3], %s11
      %s14 = sshll.u32 [#allocation2], 4
      %s15 = int_to_ptr.vmem [resolvable:$true] %s14
      %17 = dma.hbm_to_vmem [thread:$0]  %s0, 128, %s15, [#allocation3]
    $region5: #{tpu_custom_call.1} parent=1 // pred_fallthru
      _
    // Predicated region
    $region6: #{tpu_custom_call.1} parent=1 // pred_check
      _
    $region7: #{tpu_custom_call.1} parent=1 // pred_check_branch
      %19 = sbr.rel (0) target = $region9
    $region8: #{tpu_custom_call.1} parent=1 // pred_region
      %20 = dma.done [#allocation3], 128
    $region9: #{tpu_custom_call.1} parent=1 // pred_fallthru
      _
    %v21 = vld [vmem:[#allocation2] sm:$0xff]
    %22 = vst [vmem:[#allocation5] sm:$0xff] %v21
    // Predicated region
    $region10: #{tpu_custom_call.1} parent=1 // pred_check
      _
    $region11: #{tpu_custom_call.1} parent=1 // pred_check_branch
      %24 = sbr.rel (0) target = $region13
    $region12: #{tpu_custom_call.1} parent=1 // pred_region
      %s26 = ssub.s32 128, 128
      %27 = vsyncadd [#allocation4], %s26
      %s29 = sshll.u32 [#allocation5], 4
      %s30 = int_to_ptr.vmem [resolvable:$true] %s29
      %32 = dma.vmem_to_hbm [thread:$0]  %s30, 128, %s1, [#allocation4]
    $region13: #{tpu_custom_call.1} parent=1 // pred_fallthru
      _
    // Predicated region
    $region14: #{tpu_custom_call.1} parent=1 // pred_check
      _
    $region15: #{tpu_custom_call.1} parent=1 // pred_check_branch
      %34 = sbr.rel (0) target = $region17
    $region16: #{tpu_custom_call.1} parent=1 // pred_region
      %35 = dma.done [#allocation4], 128
    $region17: #{tpu_custom_call.1} parent=1 // pred_fallthru
      _
    %36 = vsyncpa [#allocation3], 1
    %37 = vsyncpa [#allocation4], 1

</llo_original>
